<compile_context>
chip_gen: v7x
topology: tpu7x:2x2x1
jax: 0.10.0
libtpu: 0.0.40
codegen_flags: <defaults>
</compile_context>

<pallas_src>
import functools

import jax
import jax.numpy as jnp
from jax import lax
from jax.experimental import pallas as pl
from jax.experimental.pallas import tpu as pltpu


def _vmem_budget_bytes():
    """~75% of physical VMEM (64 MiB on v7x, 128 MiB on v5e/v6e)."""
    cap = 64 * 1024 * 1024  # conservative fallback = v7x per-core VMEM
    try:
        info = pltpu.get_tpu_info()
        cap = int(getattr(info, "vmem_capacity_bytes", cap)) or cap
    except Exception:
        pass
    return (3 * cap) // 4


def _pick_row_tile(ho, wo, per_lane_bytes, budget_bytes, lane_cap):
    """Largest row tile T with T | Ho, lane-aligned block (T*Wo % 128 == 0 or
    T == Ho), working set under the VMEM budget and T*Wo <= lane_cap."""
    cands = [t for t in range(1, ho + 1)
             if ho % t == 0 and (t == ho or (t * wo) % 128 == 0)]
    fit = [t for t in cands
           if t * wo * per_lane_bytes <= budget_bytes and t * wo <= lane_cap]
    return fit[-1] if fit else cands[0]


def _conv_stats_kernel(xb_ref, w_ref, y_ref, stats_ref, *, inv_cnt):
    """Pass 1: one (C, 9C) x (9C, MT) MXU dot per tile + per-tile (sum, M2)."""
    x = xb_ref[0, 0]                                   # (9*C, MT), full-lane slab
    acc = jnp.dot(w_ref[...], x, preferred_element_type=jnp.float32)   # (C, MT)
    y_ref[0] = acc.astype(y_ref.dtype)                 # bf16 intermediate

    s = jnp.sum(acc, axis=1, keepdims=True)            # (C, 1) per-tile sum
    mu = s * inv_cnt                                   # per-tile mean
    d = acc - mu
    m2 = jnp.sum(d * d, axis=1, keepdims=True)         # per-tile M2 (stable)
    stats_ref[0, 0] = jnp.concatenate([s, m2], axis=1)  # (C, 2)


def _bn_act_kernel(y_ref, scale_ref, shift_ref, o_ref):
    """Pass 2: y * scale + shift, then LeakyReLU(0.01)."""
    t = y_ref[...].astype(jnp.float32) * scale_ref[...] + shift_ref[...]
    o_ref[...] = jnp.where(t > 0, t, 0.01 * t)


def downsample_forward(x, conv_w, gamma, beta, *, eps=1e-5,
                       y_dtype=jnp.bfloat16, mxu_dtype=jnp.float32):
    """x: (N, C, H, W); conv_w: (C, C, 3, 3); gamma/beta: (C,). Returns NCHW f32."""
    N, C, H, W = x.shape
    Ho = (H - 1) // 2 + 1
    Wo = (W - 1) // 2 + 1

    budget = _vmem_budget_bytes()
    y_bytes = jnp.dtype(y_dtype).itemsize
    xb_bytes = jnp.dtype(mxu_dtype).itemsize

    # ---- Pass-1 tile choice: double-buffered xb block + y block per lane. ----
    p1_per_lane = 2 * (9 * C * xb_bytes) + 2 * (C * y_bytes)
    w_block_bytes = 2 * (C * 9 * C * xb_bytes)
    T1 = _pick_row_tile(Ho, Wo, p1_per_lane,
                        max(budget - w_block_bytes, 1), lane_cap=4096)
    NB = Ho // T1
    MT = T1 * Wo

    # ---- Host prep: pad once, 9 strided tap decimations, aligned slabs. ----
    xf = x.astype(jnp.float32)
    xp = jnp.pad(xf, ((0, 0), (0, 0), (1, 1), (1, 1)), mode="reflect")
    taps = [xp[:, :, ki:ki + 2 * Ho:2, kj:kj + 2 * Wo:2]        # (N, C, Ho, Wo)
            for ki in range(3) for kj in range(3)]
    xt = jnp.stack(taps, axis=1)                                # (N, 9, C, Ho, Wo)
    xb = (xt.reshape(N, 9, C, NB, T1, Wo)
            .transpose(0, 3, 1, 2, 4, 5)
            .reshape(N, NB, 9 * C, MT)
            .astype(mxu_dtype))                                 # tap-major contraction axis
    w9 = (jnp.transpose(conv_w.astype(jnp.float32), (0, 2, 3, 1))
            .reshape(C, 9 * C)
            .astype(mxu_dtype))                                 # (C_out, 9*C_in)

    kernel1 = functools.partial(_conv_stats_kernel, inv_cnt=1.0 / float(MT))
    y, stats = pl.pallas_call(
        kernel1,
        out_shape=(jax.ShapeDtypeStruct((N, C, Ho * Wo), y_dtype),
                   jax.ShapeDtypeStruct((N, NB, C, 2), jnp.float32)),
        grid=(N, NB),
        in_specs=[
            pl.BlockSpec((1, 1, 9 * C, MT), lambda n, b: (n, b, 0, 0)),
            pl.BlockSpec((C, 9 * C), lambda n, b: (0, 0)),
        ],
        out_specs=(
            pl.BlockSpec((1, C, MT), lambda n, b: (n, 0, b)),
            pl.BlockSpec((1, 1, C, 2), lambda n, b: (n, b, 0, 0)),
        ),
        # No cross-grid scratch any more -> both axes fully parallel (2 TCs on v7x).
        compiler_params=pltpu.CompilerParams(
            dimension_semantics=("parallel", "parallel"),
            vmem_limit_bytes=int(budget)),
    )(xb, w9)

    # ---- Finalize BN batch stats in plain JAX (tiny), Chan-style merge. ----
    cnt_tile = float(MT)
    total = float(N * Ho * Wo)
    sums = stats[..., 0]                                        # (N, NB, C)
    m2s = stats[..., 1]
    mean = jnp.sum(sums, axis=(0, 1)) / total                   # (C,)
    mu_t = sums / cnt_tile
    var = (jnp.sum(m2s, axis=(0, 1))
           + cnt_tile * jnp.sum((mu_t - mean) ** 2, axis=(0, 1))) / total
    inv_std = lax.rsqrt(jnp.maximum(var, 0.0) + eps)
    scale = gamma.astype(jnp.float32) * inv_std                 # (C,)
    shift = beta.astype(jnp.float32) - mean * scale

    # ---- Pass-2 tile choice: large blocks (up to whole image per batch). ----
    p2_per_lane = 2 * C * (y_bytes + 4)
    T2 = _pick_row_tile(Ho, Wo, p2_per_lane, budget, lane_cap=32768)
    NB2 = Ho // T2
    L2 = T2 * Wo

    out = pl.pallas_call(
        _bn_act_kernel,
        out_shape=jax.ShapeDtypeStruct((N, C, Ho * Wo), jnp.float32),
        grid=(N, NB2),
        in_specs=[
            pl.BlockSpec((1, C, L2), lambda n, b: (n, 0, b)),
            pl.BlockSpec((1, C, 1), lambda n, b: (0, 0, 0)),
            pl.BlockSpec((1, C, 1), lambda n, b: (0, 0, 0)),
        ],
        out_specs=pl.BlockSpec((1, C, L2), lambda n, b: (n, 0, b)),
        compiler_params=pltpu.CompilerParams(
            dimension_semantics=("parallel", "parallel"),
            vmem_limit_bytes=int(budget)),
    )(y, scale.reshape(1, C, 1), shift.reshape(1, C, 1))

    # (N, C, Ho*Wo) -> NCHW is a pure reshape (no transpose / extra HBM pass).
    # TODO(synk): BatchNorm2d running_mean/running_var buffer updates (training
    # bookkeeping) are not emitted; forward activations are unaffected.
    return out.reshape(N, C, Ho, Wo)


def _reference(x, w, gamma, beta, eps=1e-5, slope=0.01):
    """Pure-JAX reference of the PyTorch module forward (training-mode BN)."""
    xp = jnp.pad(x, ((0, 0), (0, 0), (1, 1), (1, 1)), mode="reflect")
    y = lax.conv_general_dilated(xp, w, window_strides=(2, 2), padding="VALID",
                                 dimension_numbers=("NCHW", "OIHW", "NCHW"))
    mean = y.mean(axis=(0, 2, 3), keepdims=True)
    var = y.var(axis=(0, 2, 3), keepdims=True)
    t = ((y - mean) * lax.rsqrt(var + eps) * gamma.reshape(1, -1, 1, 1)
         + beta.reshape(1, -1, 1, 1))
    return jnp.where(t > 0, t, slope * t)


if __name__ == "__main__":
    key = jax.random.PRNGKey(0)
    k_x, k_w, k_g, k_b = jax.random.split(key, 4)

    N, C, H, W = 2, 4, 16, 16
    x = jax.random.normal(k_x, (N, C, H, W), dtype=jnp.float32)

    # Shapes match nn.Conv2d(C, C, 3, bias=False) and nn.BatchNorm2d(C).
    conv_w = jax.random.normal(k_w, (C, C, 3, 3), dtype=jnp.float32) * 0.1
    gamma = 1.0 + 0.1 * jax.random.normal(k_g, (C,), dtype=jnp.float32)
    beta = 0.1 * jax.random.normal(k_b, (C,), dtype=jnp.float32)

    out = downsample_forward(x, conv_w, gamma, beta)
    jax.block_until_ready(out)
    assert out.shape == (N, C, H // 2, W // 2), out.shape

    ref = _reference(x, conv_w, gamma, beta)
    err = float(jnp.max(jnp.abs(out - ref)))
    assert err < 5e-2, f"max abs error {err}"
    print("KERNEL_OK")
</pallas_src>

<mosaic_0001>
module attributes {stable_mosaic.version = 11 : i64} {
  func.func @_conv_stats_kernel(%arg0: i32, %arg1: i32, %arg2: memref<1x1x36x64xf32, #tpu.memory_space<vmem>>, %arg3: memref<4x36xf32, #tpu.memory_space<vmem>>, %arg4: memref<1x4x64xbf16, #tpu.memory_space<vmem>>, %arg5: memref<1x1x4x2xf32, #tpu.memory_space<vmem>>) attributes {dimension_semantics = [#tpu.dimension_semantics<parallel>, #tpu.dimension_semantics<parallel>], iteration_bounds = array<i64: 2, 1>, scalar_prefetch = 0 : i64, scratch_operands = 0 : i64, tpu.core_type = #tpu.core_type<tc>, window_params = [{transform_indices = @transform_0, window_bounds = array<i64: 1, 1, 36, 64>}, {pipeline_mode = #tpu.pipeline_mode<synchronous>, transform_indices = @transform_1, window_bounds = array<i64: 4, 36>}, {transform_indices = @transform_2, window_bounds = array<i64: 1, 4, 64>}, {transform_indices = @transform_3, window_bounds = array<i64: 1, 1, 4, 2>}]} {
    %c0 = arith.constant 0 : index
    %c0_0 = arith.constant 0 : index
    %c0_1 = arith.constant 0 : index
    %c0_2 = arith.constant 0 : index
    %0 = vector.load %arg2[%c0, %c0_0, %c0_1, %c0_2] : memref<1x1x36x64xf32, #tpu.memory_space<vmem>>, vector<1x1x36x64xf32>
    %1 = vector.shape_cast %0 : vector<1x1x36x64xf32> to vector<36x64xf32>
    %c0_3 = arith.constant 0 : index
    %c0_4 = arith.constant 0 : index
    %2 = vector.load %arg3[%c0_3, %c0_4] : memref<4x36xf32, #tpu.memory_space<vmem>>, vector<4x36xf32>
    %cst = arith.constant dense<0.000000e+00> : vector<4x64xf32>
    %3 = tpu.matmul %2, %1, %cst {dimension_numbers = #tpu.dot_dimension_numbers<[1], [0], [0], [1], [0, 0, 1, 1], [], []>} : vector<4x36xf32>, vector<36x64xf32>, vector<4x64xf32> -> vector<4x64xf32>
    %4 = arith.truncf %3 : vector<4x64xf32> to vector<4x64xbf16>
    %c0_5 = arith.constant 0 : index
    %c0_6 = arith.constant 0 : index
    %c0_7 = arith.constant 0 : index
    %5 = vector.load %arg4[%c0_5, %c0_6, %c0_7] : memref<1x4x64xbf16, #tpu.memory_space<vmem>>, vector<1x4x64xbf16>
    %6 = vector.shape_cast %5 : vector<1x4x64xbf16> to vector<4x64xbf16>
    %7 = vector.shape_cast %4 : vector<4x64xbf16> to vector<1x4x64xbf16>
    tpu.vector_store %arg4[%c0_5, %c0_6, %c0_7], %7 {strides = array<i32>} : memref<1x4x64xbf16, #tpu.memory_space<vmem>>, vector<1x4x64xbf16>,
    %cst_8 = arith.constant dense<0.000000e+00> : vector<4xf32>
    %8 = vector.multi_reduction <add>, %3, %cst_8 [1] : vector<4x64xf32> to vector<4xf32>
    %9 = vector.shape_cast %8 : vector<4xf32> to vector<4x1xf32>
    %cst_9 = arith.constant 1.562500e-02 : f32
    %10 = vector.broadcast %cst_9 : f32 to vector<4x1xf32>
    %11 = arith.mulf %9, %10 : vector<4x1xf32>
    %12 = vector.broadcast %11 : vector<4x1xf32> to vector<4x64xf32>
    %13 = arith.subf %3, %12 : vector<4x64xf32>
    %14 = arith.mulf %13, %13 : vector<4x64xf32>
    %cst_10 = arith.constant dense<0.000000e+00> : vector<4xf32>
    %15 = vector.multi_reduction <add>, %14, %cst_10 [1] : vector<4x64xf32> to vector<4xf32>
    %16 = vector.shape_cast %15 : vector<4xf32> to vector<4x1xf32>
    %17 = tpu.concatenate %9, %16 in 1 : vector<4x1xf32>, vector<4x1xf32> -> vector<4x2xf32>
    %c0_11 = arith.constant 0 : index
    %c0_12 = arith.constant 0 : index
    %c0_13 = arith.constant 0 : index
    %c0_14 = arith.constant 0 : index
    %18 = vector.load %arg5[%c0_11, %c0_12, %c0_13, %c0_14] : memref<1x1x4x2xf32, #tpu.memory_space<vmem>>, vector<1x1x4x2xf32>
    %19 = vector.shape_cast %18 : vector<1x1x4x2xf32> to vector<4x2xf32>
    %20 = vector.shape_cast %17 : vector<4x2xf32> to vector<1x1x4x2xf32>
    tpu.vector_store %arg5[%c0_11, %c0_12, %c0_13, %c0_14], %20 {strides = array<i32>} : memref<1x1x4x2xf32, #tpu.memory_space<vmem>>, vector<1x1x4x2xf32>,
    return
  }
  func.func @transform_0(%arg0: i32, %arg1: i32) -> (i32, i32, i32, i32) {
    %c0_i32 = arith.constant 0 : i32
    %c0_i32_0 = arith.constant 0 : i32
    %c0_i32_1 = arith.constant 0 : i32
    return %arg0, %arg1, %c0_i32, %c0_i32_0 : i32, i32, i32, i32
  }
  func.func @transform_1(%arg0: i32, %arg1: i32) -> (i32, i32) {
    %c0_i32 = arith.constant 0 : i32
    %c0_i32_0 = arith.constant 0 : i32
    %c0_i32_1 = arith.constant 0 : i32
    return %c0_i32, %c0_i32_0 : i32, i32
  }
  func.func @transform_2(%arg0: i32, %arg1: i32) -> (i32, i32, i32) {
    %c0_i32 = arith.constant 0 : i32
    %c0_i32_0 = arith.constant 0 : i32
    return %arg0, %c0_i32, %arg1 : i32, i32, i32
  }
  func.func @transform_3(%arg0: i32, %arg1: i32) -> (i32, i32, i32, i32) {
    %c0_i32 = arith.constant 0 : i32
    %c0_i32_0 = arith.constant 0 : i32
    %c0_i32_1 = arith.constant 0 : i32
    return %arg0, %arg1, %c0_i32, %c0_i32_0 : i32, i32, i32, i32
  }
}

</mosaic_0001>

<llo_original>
// kernel: tpu_custom_call.1
$region0: #{tpu_custom_call.1}
  #allocation0 [shape = 'u32[]', space=smem, size = 0x4, offset = 0x4, fixed_abs, tag = 'smem constant byte address 0x4 - core index']
  #allocation1 [shape = 'u32[144,128]{1,0:T(1,128)}', space=vmem, size = 0x12000, scoped, tag = 'internal scratch']
  %s0 = inlined_call_operand.vmem [shape: f32[2,1,36,64], index: 0, kind: input, shape index: {}]
  %s1 = inlined_call_operand.vmem [shape: f32[4,36], index: 1, kind: input, shape index: {}]
  %s2 = inlined_call_operand.hbm [shape: bf16[2,4,64], index: 2, kind: output, shape index: {0}]
  %s3 = inlined_call_operand.vmem [shape: f32[2,1,4,2], index: 3, kind: output, shape index: {1}]
  %4 = xla_tuple %s2, %s3
  %s5 = sld [smem:[#allocation0]]
  $region49: #{tpu_custom_call.1} parent=0
    _
  %s7 = ssub.s32 1, %s5
  %s8 = scalar_select 0, %s7, %s5
  $region1: #{tpu_custom_call.1} parent=0
    #allocation2 [shape = 'u8[2048]{0}', space=vmem, size = 0x800, scoped, tag = 'output window, operand 0']
    #allocation3 [shape = 's32[2]{0}', space=sflag, size = 0x8, scoped, tag = 'scoped memory for tpu_custom_call.1']
    %9 = vsyncpa [#allocation3], 0
    %s10 = scalar_lea.sflag [#allocation3], 1
    %11 = vsyncpa %s10, 0
    loop: start=0, step=1, limit=4
    $region2: #{tpu_custom_call.1} parent=1 // loop_pre_header
      _
    $region3: #{tpu_custom_call.1} parent=1 // loop_header
      %s13 = sphi 0, %s17
      %p14 = scmp.ge.s32.totalorder %s13, 4
      %s20 = sphi 0, %s32
      %s21 = sphi 0, %s28
      %s22 = sphi 0, %s20
      %s23 = sphi 0, %s21
      %s24 = sphi 0, %s22
      %s25 = sphi 0, %s23
      %s37 = sphi 0, %s39
      %s40 = sphi 0, %s37
      %s41 = sphi 0, %s40
      %s57 = sphi 0, %s41
      %s61 = sphi 0, %s61
      %s63 = sphi 0, %s61
      %s64 = sphi 0, %s63
      %s78 = sphi 0, %s64
      %s86 = sphi 0, %s88
      %s89 = sphi 0, %s86
      %s90 = sphi 0, %s89
      %s106 = sphi 0, %s90
      %s114 = sphi 0, %s116
      %s117 = sphi 0, %s114
      %s118 = sphi 0, %s117
      %s134 = sphi 0, %s118
    $region4: #{tpu_custom_call.1} parent=1 // loop_header_branch
      %16 = sbr.rel (%p14) target = $region8
    $region5: #{tpu_custom_call.1} parent=1 // loop_body
      %s18 = ssub.s32 %s13, 1
      %s19 = ssub.s32 %s13, 2
      %s26 = sadd.s32 1, %s21
      %p27 = scmp.ge.s32.totalorder %s26, 1
      %s28 = scalar_select %p27, 0, %s26
      %s29 = sadd.s32 1, %s20
      %s30 = scalar_select %p27, %s29, %s20
      %p31 = scmp.ge.s32.totalorder %s30, 2
      %s32 = scalar_select %p31, 0, %s30
      %s33 = ssub.s32 %s20, %s32
      %s34 = ssub.s32 %s21, %s28
      %s35 = sor.u32 %s33, %s34
      %p36 = scmp.eq.s32.totalorder %s35, 0
      %s38 = sadd.s32 %s37, 1
      %s39 = scalar_select %p36, %s37, %s38
      %p42 = pneg %p36
      %p43 = scmp.eq.s32.totalorder %s13, 1
      %p44 = por %p42, %p43
      %p45 = scmp.ne.s32.totalorder %s37, %s40
      %p46 = scmp.eq.s32.totalorder %s13, 0
      %p47 = por %p45, %p46
      %p48 = scmp.ne.s32.totalorder %s37, %s40
      %p49 = scmp.eq.s32.totalorder %s18, 1
      %p50 = por %p48, %p49
      %p51 = scmp.ne.s32.totalorder %s40, %s41
      %p52 = scmp.eq.s32.totalorder %s18, 0
      %p53 = por %p51, %p52
      %p54 = scmp.ne.s32.totalorder %s40, %s41
      %p55 = scmp.eq.s32.totalorder %s19, 1
      %p56 = por %p54, %p55
      %p58 = scmp.ne.s32.totalorder %s41, %s57
      %p59 = scmp.eq.s32.totalorder %s19, 0
      %p60 = por %p58, %p59
      %s62 = sadd.s32 %s61, 1
      %p65 = scmp.eq.s32.totalorder %s13, 1
      %p66 = scmp.ne.s32.totalorder %s61, %s63
      %p67 = scmp.eq.s32.totalorder %s13, 0
      %p68 = por %p66, %p67
      %p69 = scmp.ne.s32.totalorder %s61, %s63
      %p70 = scmp.eq.s32.totalorder %s18, 1
      %p71 = por %p69, %p70
      %p72 = scmp.ne.s32.totalorder %s63, %s64
      %p73 = scmp.eq.s32.totalorder %s18, 0
      %p74 = por %p72, %p73
      %p75 = scmp.ne.s32.totalorder %s63, %s64
      %p76 = scmp.eq.s32.totalorder %s19, 1
      %p77 = por %p75, %p76
      %p79 = scmp.ne.s32.totalorder %s64, %s78
      %p80 = scmp.eq.s32.totalorder %s19, 0
      %p81 = por %p79, %p80
      %s82 = ssub.s32 %s20, %s32
      %s83 = ssub.s32 %s21, %s28
      %s84 = sor.u32 %s82, %s83
      %p85 = scmp.eq.s32.totalorder %s84, 0
      %s87 = sadd.s32 %s86, 1
      %s88 = scalar_select %p85, %s86, %s87
      %p91 = pneg %p85
      %p92 = scmp.eq.s32.totalorder %s13, 1
      %p93 = por %p91, %p92
      %p94 = scmp.ne.s32.totalorder %s86, %s89
      %p95 = scmp.eq.s32.totalorder %s13, 0
      %p96 = por %p94, %p95
      %p97 = scmp.ne.s32.totalorder %s86, %s89
      %p98 = scmp.eq.s32.totalorder %s18, 1
      %p99 = por %p97, %p98
      %p100 = scmp.ne.s32.totalorder %s89, %s90
      %p101 = scmp.eq.s32.totalorder %s18, 0
      %p102 = por %p100, %p101
      %p103 = scmp.ne.s32.totalorder %s89, %s90
      %p104 = scmp.eq.s32.totalorder %s19, 1
      %p105 = por %p103, %p104
      %p107 = scmp.ne.s32.totalorder %s90, %s106
      %p108 = scmp.eq.s32.totalorder %s19, 0
      %p109 = por %p107, %p108
      %s110 = ssub.s32 %s20, %s32
      %s111 = ssub.s32 %s21, %s28
      %s112 = sor.u32 %s110, %s111
      %p113 = scmp.eq.s32.totalorder %s112, 0
      %s115 = sadd.s32 %s114, 1
      %s116 = scalar_select %p113, %s114, %s115
      %p119 = pneg %p113
      %p120 = scmp.eq.s32.totalorder %s13, 1
      %p121 = por %p119, %p120
      %p122 = scmp.ne.s32.totalorder %s114, %s117
      %p123 = scmp.eq.s32.totalorder %s13, 0
      %p124 = por %p122, %p123
      %p125 = scmp.ne.s32.totalorder %s114, %s117
      %p126 = scmp.eq.s32.totalorder %s18, 1
      %p127 = por %p125, %p126
      %p128 = scmp.ne.s32.totalorder %s117, %s118
      %p129 = scmp.eq.s32.totalorder %s18, 0
      %p130 = por %p128, %p129
      %p131 = scmp.ne.s32.totalorder %s117, %s118
      %p132 = scmp.eq.s32.totalorder %s19, 1
      %p133 = por %p131, %p132
      %p135 = scmp.ne.s32.totalorder %s118, %s134
      %p136 = scmp.eq.s32.totalorder %s19, 0
      %p137 = por %p135, %p136
      %p138 = scmp.le.s32.totalorder 1, %s13
      %p139 = scmp.lt.s32.totalorder %s13, 3
      %p140 = pnand %p138, %p139
      %p141 = pneg %p140
      // Predicated region
      $region9: #{tpu_custom_call.1} parent=5 // pred_check
        _
      $region10: #{tpu_custom_call.1} parent=5 // pred_check_branch
        %143 = sbr.rel (%p140) target = $region12
      $region11: #{tpu_custom_call.1} parent=5 // pred_region
        %s144 = ssub.s32 %s13, 1
        // Predicated region
        $region13: #{tpu_custom_call.1} parent=11 // pred_check
          %p145 = pneg %p74
        $region14: #{tpu_custom_call.1} parent=11 // pred_check_branch
          %147 = sbr.rel (%p145) target = $region16
        $region15: #{tpu_custom_call.1} parent=11 // pred_region
          _
        $region16: #{tpu_custom_call.1} parent=11 // pred_fallthru
          _
      $region12: #{tpu_custom_call.1} parent=5 // pred_fallthru
        _
      %p148 = scmp.lt.s32.totalorder %s13, 2
      // Predicated region
      $region17: #{tpu_custom_call.1} parent=5 // pred_check
        %p149 = pneg %p148
      $region18: #{tpu_custom_call.1} parent=5 // pred_check_branch
        %151 = sbr.rel (%p149) target = $region20
      $region19: #{tpu_custom_call.1} parent=5 // pred_region
        // Predicated region
        $region21: #{tpu_custom_call.1} parent=19 // pred_check
          %p152 = pneg %p47
        $region22: #{tpu_custom_call.1} parent=19 // pred_check_branch
          %154 = sbr.rel (%p152) target = $region24
        $region23: #{tpu_custom_call.1} parent=19 // pred_region
          %p155 = scmp.lt.s32.totalorder %s20, 1
          %s156 = scalar_select %p155, %s20, 1
          %p157 = scmp.lt.s32.totalorder %s21, 0
          %s158 = scalar_select %p157, %s21, 0
          %s159 = smul.addr %s158, 5
          %s160 = smul.addr %s156, 5
          %s161 = sadd.s32 %s159, %s160
          %s162 = smul.addr %s161, 8
          %s163 = scalar_lea.vmem %s0, %s162
        $region24: #{tpu_custom_call.1} parent=19 // pred_fallthru
          _
      $region20: #{tpu_custom_call.1} parent=5 // pred_fallthru
        _
      %p164 = scmp.le.s32.totalorder 1, %s13
      %p165 = scmp.lt.s32.totalorder %s13, 3
      %p166 = pnand %p164, %p165
      %p167 = pneg %p166
      // Predicated region
      $region25: #{tpu_custom_call.1} parent=5 // pred_check
        _
      $region26: #{tpu_custom_call.1} parent=5 // pred_check_branch
        %169 = sbr.rel (%p166) target = $region28
      $region27: #{tpu_custom_call.1} parent=5 // pred_region
        %s170 = ssub.s32 %s13, 1
        %p171 = scmp.lt.s32.totalorder %s22, 1
        %s172 = scalar_select %p171, %s22, 1
        %p173 = scmp.lt.s32.totalorder %s23, 0
        %s174 = scalar_select %p173, %s23, 0
        %s175 = smul.addr %s174, 5
        %s176 = smul.addr %s172, 5
        %s177 = sadd.s32 %s175, %s176
        %s178 = smul.addr %s177, 8
        %s179 = scalar_lea.vmem %s0, %s178
        %p180 = pneg %p53
        %p181 = pneg %p50
        %p182 = pneg %p74
        %p183 = pneg %p71
        %p184 = pneg %p102
        %p185 = pneg %p99
        %s186 = sand.u32 %s89, 1
        %s187 = scalar_lea.sflag [#allocation3], %s186
        %s188 = sand.u32 %s89, 1
        %s189 = smul.addr %s188, 2
        %s190 = scalar_lea.vmem [#allocation2], %s189
        %p191 = pneg %p130
        %p192 = pneg %p127
        %p193 = scmp.lt.s32.totalorder %s22, 1
        %s194 = scalar_select %p193, %s22, 1
        %p195 = scmp.lt.s32.totalorder %s23, 0
        %s196 = scalar_select %p195, %s23, 0
        %s197 = sadd.s32 %s196, %s194
        %s198 = smul.addr %s197, 4
        %s199 = scalar_lea.vmem %s3, %s198
        %p200 = scmp.lt.s32.totalorder %s22, 1
        %s201 = scalar_select %p200, %s22, 1
        %p202 = scmp.lt.s32.totalorder %s23, 0
        %s203 = scalar_select %p202, %s23, 0
        %s204 = smul.addr %s203, 5
        %s205 = smul.addr %s201, 5
        %s206 = sadd.s32 %s204, %s205
        %s207 = smul.addr %s206, 8
        %s208 = scalar_lea.vmem %s0, %s207
        %p209 = scmp.lt.s32.totalorder %s22, 1
        %s210 = scalar_select %p209, %s22, 1
        %p211 = scmp.lt.s32.totalorder %s23, 0
        %s212 = scalar_select %p211, %s23, 0
        %s213 = sadd.s32 %s212, %s210
        %s214 = smul.addr %s213, 4
        %s215 = scalar_lea.vmem %s3, %s214
        %v216 = vld [vmem:[%s208] sm:$0xff]
        %v217 = vld [vmem:[%s208 + $0x8] sm:$0xff]
        %v218 = vld [vmem:[%s208 + $0x10] sm:$0xff]
        %v219 = vld [vmem:[%s208 + $0x18] sm:$0xff]
        %v220 = vld [vmem:[%s208 + $0x20] sm:$0xf]
        %v221 = vld [vmem:[%s1] sm:$0xf]
        %vm222 = vcmask 293888
        %v224 = vsel %vm222, %v221, 0
        %vm226 = vcmask 1043456
        %v228 = vsel %vm226, %v220, 0
        %230 = vmatprep.subr.mxu0 0.0
        %231 = vmatpush1.msra.mxu0 %v216
        %232 = vmatprep.subr.mxu0 0.0
        %233 = vmatpush1.msra.mxu0 %v217
        %234 = vmatprep.subr.mxu0 0.0
        %235 = vmatpush1.msra.mxu0 %v218
        %236 = vmatprep.subr.mxu0 0.0
        %237 = vmatpush1.msra.mxu0 %v219
        %238 = vmatprep.subr.mxu0 0.0
        %239 = vmatpush1.msra.mxu0 %v228
        %240 = vmatprep.subr.mxu0 0.0
        %241 = vmatpush1.msra.mxu0 0.0
        %242 = vmatprep.subr.mxu0 0.0
        %243 = vmatpush1.msra.mxu0 0.0
        %244 = vmatprep.subr.mxu0 0.0
        %245 = vmatpush1.msra.mxu0 0.0
        %246 = vmatprep.subr.mxu0 0.0
        %247 = vmatpush1.msra.mxu0 0.0
        %248 = vmatprep.subr.mxu0 0.0
        %249 = vmatpush1.msra.mxu0 0.0
        %250 = vmatprep.subr.mxu0 0.0
        %251 = vmatpush1.msra.mxu0 0.0
        %252 = vmatprep.subr.mxu0 0.0
        %253 = vmatpush1.msra.mxu0 0.0
        %254 = vmatprep.subr.mxu0 0.0
        %255 = vmatpush1.msra.mxu0 0.0
        %256 = vmatprep.subr.mxu0 0.0
        %257 = vmatpush1.msra.mxu0 0.0
        %258 = vmatprep.subr.mxu0 0.0
        %259 = vmatpush1.msra.mxu0 0.0
        %260 = vmatprep.subr.mxu0 0.0
        %261 = vmatpush1.msra.mxu0 0.0
        %262 = vmatprep.subr.mxu0 0.0
        %263 = vmatpush1.msra.mxu0 0.0
        %264 = vmatprep.subr.mxu0 0.0
        %265 = vmatpush1.msra.mxu0 0.0
        %266 = vmatprep.subr.mxu0 0.0
        %267 = vmatpush1.msra.mxu0 0.0
        %268 = vmatprep.subr.mxu0 0.0
        %269 = vmatpush1.msra.mxu0 0.0
        %270 = vmatprep.subr.mxu0 0.0
        %271 = vmatpush1.msra.mxu0 0.0
        %272 = vmatprep.subr.mxu0 0.0
        %273 = vmatpush1.msra.mxu0 0.0
        %274 = vmatprep.subr.mxu0 0.0
        %275 = vmatpush1.msra.mxu0 0.0
        %276 = vmatprep.subr.mxu0 0.0
        %277 = vmatpush1.msra.mxu0 0.0
        %278 = vmatprep.subr.mxu0 0.0
        %279 = vmatpush1.msra.mxu0 0.0
        %280 = vmatprep.subr.mxu0 0.0
        %281 = vmatpush1.msra.mxu0 0.0
        %282 = vmatprep.subr.mxu0 0.0
        %283 = vmatpush1.msra.mxu0 0.0
        %284 = vmatprep.subr.mxu0 0.0
        %285 = vmatpush1.msra.mxu0 0.0
        %286 = vmatprep.subr.mxu0 0.0
        %287 = vmatpush1.msra.mxu0 0.0
        %288 = vmatprep.subr.mxu0 0.0
        %289 = vmatpush1.msra.mxu0 0.0
        %290 = vmatprep.subr.mxu0 0.0
        %291 = vmatpush1.msra.mxu0 0.0
        %292 = vmatprep.subr.mxu0 0.0
        %293 = vmatpush1.msra.mxu0 0.0
        %294 = vmatprep.mubr.f32.mxu0 0.0
        %295 = vmatmul.mubr.f32.gmra.mrb[0].mxu0 %v224
        %v296 = vpop.f32.mrb[0].mxu0
        %v297 = vadd.f32 0.0, %v296
        %v298 = vpop.f32.mrb[0].mxu0
        %299 = vdwg.mxu0
        %v300 = vpack.c.bf16 %v297, %v297
        %vm301 = vcmask 517120
        %302 = vst.msk [vmem:[%s190] sm:$0x3] %vm301, %v300
        %vm303 = vcmask 519168
        %v304 = vsel %vm303, %v297, 0.0
        %305 = vadd.xlane.f32.xlu0 %v304
        %v306 = vpop.xlane.xlu0 %305
        %v307 = vmul.f32 %v306, 0.015625
        %v308 = vsub.f32 %v297, %v307
        %v309 = vmul.f32 %v308, %v308
        %v310 = vsel %vm303, %v309, 0.0
        %311 = vadd.xlane.f32.xlu0 %v310
        %v312 = vpop.xlane.xlu0 %311
        %vm313 = vcmask 7168
        %v314 = vsel %vm313, %v306, %v312
        %vm315 = vcmask 11264
        %316 = vst.msk [vmem:[%s215] sm:$0xf] %vm315, %v314
        %s317 = sand.u32 %s89, 1
        %s318 = scalar_lea.sflag [#allocation3], %s317
        %s319 = sand.u32 %s89, 1
        %s320 = smul.addr %s319, 2
        %s321 = scalar_lea.vmem [#allocation2], %s320
        %p322 = scmp.lt.s32.totalorder %s22, 1
        %s323 = scalar_select %p322, %s22, 1
        %p324 = scmp.lt.s32.totalorder %s23, 0
        %s325 = scalar_select %p324, %s23, 0
        %s326 = sadd.s32 %s325, %s323
        %s327 = smul.addr %s326, 4
        %s328 = scalar_lea.vmem %s3, %s327
        // Predicated region
        $region29: #{tpu_custom_call.1} parent=27 // pred_check
          %p329 = pneg %p99
        $region30: #{tpu_custom_call.1} parent=27 // pred_check_branch
          %331 = sbr.rel (%p329) target = $region32
        $region31: #{tpu_custom_call.1} parent=27 // pred_region
          %s333 = ssub.s32 32, 32
          %334 = vsyncadd %s318, %s333
          %s335 = sadd.s32 %s23, %s22
          %s336 = smul.addr %s335, 32
          %s337 = scalar_lea.hbm %s2, %s336
          %s339 = sshll.u32 %s321, 4
          %s340 = int_to_ptr.vmem [resolvable:$true] %s339
          %342 = dma.vmem_to_hbm [thread:$0]  %s340, 32, %s337, %s318
        $region32: #{tpu_custom_call.1} parent=27 // pred_fallthru
          _
        // Predicated region
        $region33: #{tpu_custom_call.1} parent=27 // pred_check
          %p343 = pneg %p127
        $region34: #{tpu_custom_call.1} parent=27 // pred_check_branch
          %345 = sbr.rel (%p343) target = $region36
        $region35: #{tpu_custom_call.1} parent=27 // pred_region
          _
        $region36: #{tpu_custom_call.1} parent=27 // pred_fallthru
          _
      $region28: #{tpu_custom_call.1} parent=5 // pred_fallthru
        _
      %p346 = scmp.le.s32.totalorder 2, %s13
      // Predicated region
      $region37: #{tpu_custom_call.1} parent=5 // pred_check
        %p347 = pneg %p346
      $region38: #{tpu_custom_call.1} parent=5 // pred_check_branch
        %349 = sbr.rel (%p347) target = $region40
      $region39: #{tpu_custom_call.1} parent=5 // pred_region
        %s350 = ssub.s32 %s13, 2
        // Predicated region
        $region41: #{tpu_custom_call.1} parent=39 // pred_check
          %p351 = pneg %p105
        $region42: #{tpu_custom_call.1} parent=39 // pred_check_branch
          %353 = sbr.rel (%p351) target = $region44
        $region43: #{tpu_custom_call.1} parent=39 // pred_region
          %s354 = sand.u32 %s90, 1
          %s355 = scalar_lea.sflag [#allocation3], %s354
          %s356 = sand.u32 %s90, 1
          %s357 = smul.addr %s356, 2
          %s358 = scalar_lea.vmem [#allocation2], %s357
          %359 = dma.done %s355, 32
        $region44: #{tpu_custom_call.1} parent=39 // pred_fallthru
          _
        // Predicated region
        $region45: #{tpu_custom_call.1} parent=39 // pred_check
          %p360 = pneg %p133
        $region46: #{tpu_custom_call.1} parent=39 // pred_check_branch
          %362 = sbr.rel (%p360) target = $region48
        $region47: #{tpu_custom_call.1} parent=39 // pred_region
          %p363 = scmp.lt.s32.totalorder %s24, 1
          %s364 = scalar_select %p363, %s24, 1
          %p365 = scmp.lt.s32.totalorder %s25, 0
          %s366 = scalar_select %p365, %s25, 0
          %s367 = sadd.s32 %s366, %s364
          %s368 = smul.addr %s367, 4
          %s369 = scalar_lea.vmem %s3, %s368
        $region48: #{tpu_custom_call.1} parent=39 // pred_fallthru
          _
      $region40: #{tpu_custom_call.1} parent=5 // pred_fallthru
        _
    $region6: #{tpu_custom_call.1} parent=1 // loop_footer
      %s17 = sadd.s32 1, %s13
    $region7: #{tpu_custom_call.1} parent=1 // loop_footer_branch
      %12 = sbr.rel target = $region3
    $region8: #{tpu_custom_call.1} parent=1 // loop_exit
      _
    %370 = vsyncpa [#allocation3], 1
    %s371 = scalar_lea.sflag [#allocation3], 1
    %372 = vsyncpa %s371, 1

</llo_original>
